<compile_context>
chip_gen: v6e
topology: v6e:2x2x1
jax: 0.10.0
libtpu: 0.0.40
codegen_flags: <defaults>
</compile_context>

<pallas_src>
import functools
import math

import jax
import jax.numpy as jnp
from jax import lax
from jax.experimental import pallas as pl
from jax.experimental.pallas import tpu as pltpu

_LN_EPS = 1e-5                    # torch.nn.LayerNorm default (affine = identity)
_MASK_FILL = -1000000000.0        # torch masked_fill_ value


def _cparams(*sems):
    return pltpu.CompilerParams(
        dimension_semantics=sems,
        vmem_limit_bytes=64 * 1024 * 1024,
    )


# ----------------------------------------------------------------------------
# Kernels
# ----------------------------------------------------------------------------
def _qkv_proj_self_kernel(x_ref, w_ref, q_ref, k_ref, v_ref, *, n_heads, d_k, d_v):
    # x_ref: (1, t, d_model); w_ref: (d_model, hdk + hdk + hdv) = [Wq | Wk | Wv]
    # Outputs are head-major: q (1, H, t, d_k), k (1, H, t, d_k), v (1, H, t, d_v).
    hdk = n_heads * d_k
    y = jnp.dot(x_ref[0], w_ref[...],
                preferred_element_type=jnp.float32).astype(q_ref.dtype)
    # Static per-head slice *stores* only (cheap); all matmuls stay head-batched.
    for h in range(n_heads):
        q_ref[0, h] = y[:, h * d_k:(h + 1) * d_k]
        k_ref[0, h] = y[:, hdk + h * d_k: hdk + (h + 1) * d_k]
        v_ref[0, h] = y[:, 2 * hdk + h * d_v: 2 * hdk + (h + 1) * d_v]


def _qkv_proj_cross_kernel(xq_ref, xkv_ref, wq_ref, wkv_ref,
                           q_ref, k_ref, v_ref, *, n_heads, d_k, d_v):
    # xq_ref: (1, Lq, d_model); xkv_ref: (1, Lk, d_model)
    # wq_ref: (d_model, hdk); wkv_ref: (d_model, hdk + hdv) = [Wk | Wv]
    hdk = n_heads * d_k
    yq = jnp.dot(xq_ref[0], wq_ref[...],
                 preferred_element_type=jnp.float32).astype(q_ref.dtype)
    ykv = jnp.dot(xkv_ref[0], wkv_ref[...],
                  preferred_element_type=jnp.float32).astype(k_ref.dtype)
    for h in range(n_heads):
        q_ref[0, h] = yq[:, h * d_k:(h + 1) * d_k]
        k_ref[0, h] = ykv[:, h * d_k:(h + 1) * d_k]
        v_ref[0, h] = ykv[:, hdk + h * d_v: hdk + (h + 1) * d_v]


def _mha_attn_ln_kernel(q_ref, k_ref, v_ref, mask_ref, res_ref, wo_ref,
                        out_ref, attn_ref, *, d_k, eps):
    # q_ref:    (1, H, tq, d_k)      k_ref: (1, H, Lk, d_k)   v_ref: (1, H, Lk, d_v)
    # mask_ref: (1, tq, Lk) int8 (shared across heads; nonzero == masked)
    # res_ref:  (1, tq, d_model)     wo_ref: (H, d_v, d_model)
    # out_ref:  (1, tq, d_model)     attn_ref: (1, H, tq, Lk)
    scale = jnp.asarray(1.0 / math.sqrt(d_k), q_ref.dtype)
    q = q_ref[0] * scale            # fold 1/sqrt(d_k) into Q (Lq*d_k muls, not Lq*Lk)
    k = k_ref[0]
    v = v_ref[0]
    masked = (mask_ref[0] != 0)[None, :, :]          # (1, tq, Lk) -> broadcast to H

    # QK^T, all heads in one batched contraction (native-dtype MXU, f32 acc).
    s = jnp.einsum("hqd,hkd->hqk", q, k, preferred_element_type=jnp.float32)
    s = jnp.where(masked, jnp.float32(_MASK_FILL), s)

    # Numerically-stable softmax; divide on the EUP (approx recip + 1 Newton step).
    m = jnp.max(s, axis=-1, keepdims=True)
    e = jnp.exp(s - m)
    denom = jnp.sum(e, axis=-1, keepdims=True)
    inv = pl.reciprocal(denom, approx=True)
    inv = inv * (2.0 - denom * inv)
    p = e * inv                                       # (H, tq, Lk) f32

    # Module's forward() returns attn, so it must be written (bf16 by default).
    attn_ref[0] = p.astype(attn_ref.dtype)

    # P @ V, all heads batched.
    ctx = jnp.einsum("hqk,hkd->hqd", p.astype(v.dtype), v,
                     preferred_element_type=jnp.float32)   # (H, tq, d_v)

    # Fused output projection (+ sum over heads) + residual + LayerNorm.
    yh = jnp.einsum("hqd,hdm->hqm", ctx.astype(wo_ref.dtype), wo_ref[...],
                    preferred_element_type=jnp.float32)    # (H, tq, d_model)
    y = jnp.sum(yh, axis=0) + res_ref[0].astype(jnp.float32)
    mu = jnp.mean(y, axis=-1, keepdims=True)
    var = jnp.mean(jnp.square(y - mu), axis=-1, keepdims=True)
    out_ref[0] = ((y - mu) * lax.rsqrt(var + eps)).astype(out_ref.dtype)


def _ffn_add_ln_kernel(x_ref, w1_ref, w2_ref, out_ref, *, eps):
    # x_ref: (1, tl, d_model), w1: (d_model, d_ff), w2: (d_ff, d_model)
    x = x_ref[0]                                      # native dtype into the MXU
    h = jnp.maximum(jnp.dot(x, w1_ref[...],
                            preferred_element_type=jnp.float32), 0.0)
    y = jnp.dot(h.astype(w2_ref.dtype), w2_ref[...],
                preferred_element_type=jnp.float32) + x.astype(jnp.float32)
    mu = jnp.mean(y, axis=-1, keepdims=True)
    var = jnp.mean(jnp.square(y - mu), axis=-1, keepdims=True)
    out_ref[0] = ((y - mu) * lax.rsqrt(var + eps)).astype(out_ref.dtype)
    # TODO(synk): for very large d_ff, tile d_ff as a reduction grid axis with a
    # VMEM accumulator + pl.when init instead of holding full w1/w2 blocks.


# ----------------------------------------------------------------------------
# Wrappers
# ----------------------------------------------------------------------------
def _mha_forward(x_q, x_kv, mask, w_q, w_k, w_v, w_o, *,
                 n_heads, d_k, d_v, q_block=256, attn_dtype=jnp.bfloat16):
    B, Lq, d_model = x_q.shape
    Lk = x_kv.shape[1]
    hdk, hdv = n_heads * d_k, n_heads * d_v

    qkv_shapes = (
        jax.ShapeDtypeStruct((B, n_heads, Lq, d_k), x_q.dtype),
        jax.ShapeDtypeStruct((B, n_heads, Lk, d_k), x_q.dtype),
        jax.ShapeDtypeStruct((B, n_heads, Lk, d_v), x_q.dtype),
    )

    # ---- fused QKV projection (head-major q/k/v outputs) ----
    if x_q is x_kv:
        # Self-attention: one wide matmul with [Wq | Wk | Wv], tiled over L.
        tl = Lq if Lq <= q_block else q_block
        assert Lq % tl == 0, "sequence length must be a multiple of the tile"
        w_qkv = jnp.concatenate([w_q, w_k, w_v], axis=1)   # (d_model, 2*hdk+hdv)
        q, k, v = pl.pallas_call(
            functools.partial(_qkv_proj_self_kernel,
                              n_heads=n_heads, d_k=d_k, d_v=d_v),
            out_shape=qkv_shapes,
            grid_spec=pltpu.PrefetchScalarGridSpec(
                num_scalar_prefetch=0,
                grid=(B, Lq // tl),
                in_specs=[
                    pl.BlockSpec((1, tl, d_model), lambda b, i: (b, i, 0)),
                    pl.BlockSpec((d_model, 2 * hdk + hdv), lambda b, i: (0, 0)),
                ],
                out_specs=[
                    pl.BlockSpec((1, n_heads, tl, d_k), lambda b, i: (b, 0, i, 0)),
                    pl.BlockSpec((1, n_heads, tl, d_k), lambda b, i: (b, 0, i, 0)),
                    pl.BlockSpec((1, n_heads, tl, d_v), lambda b, i: (b, 0, i, 0)),
                ],
            ),
            compiler_params=_cparams("parallel", "parallel"),
        )(x_q, w_qkv)
    else:
        # Cross-attention: Q from x_q, K/V from x_kv with [Wk | Wv].
        # TODO(synk): tile Lq / Lk here too for very long sequences.
        w_kv = jnp.concatenate([w_k, w_v], axis=1)          # (d_model, hdk+hdv)
        q, k, v = pl.pallas_call(
            functools.partial(_qkv_proj_cross_kernel,
                              n_heads=n_heads, d_k=d_k, d_v=d_v),
            out_shape=qkv_shapes,
            grid_spec=pltpu.PrefetchScalarGridSpec(
                num_scalar_prefetch=0,
                grid=(B,),
                in_specs=[
                    pl.BlockSpec((1, Lq, d_model), lambda b: (b, 0, 0)),
                    pl.BlockSpec((1, Lk, d_model), lambda b: (b, 0, 0)),
                    pl.BlockSpec((d_model, hdk), lambda b: (0, 0)),
                    pl.BlockSpec((d_model, hdk + hdv), lambda b: (0, 0)),
                ],
                out_specs=[
                    pl.BlockSpec((1, n_heads, Lq, d_k), lambda b: (b, 0, 0, 0)),
                    pl.BlockSpec((1, n_heads, Lk, d_k), lambda b: (b, 0, 0, 0)),
                    pl.BlockSpec((1, n_heads, Lk, d_v), lambda b: (b, 0, 0, 0)),
                ],
            ),
            compiler_params=_cparams("parallel"),
        )(x_q, x_kv, w_q, w_kv)

    # ---- fused attention core + output projection + residual + LayerNorm ----
    tq = Lq if Lq <= q_block else q_block
    assert Lq % tq == 0, "Lq must be a multiple of the query tile"
    n_qt = Lq // tq

    mask_i8 = mask.astype(jnp.int8)            # 1-byte mask, shared by all heads
    w_o_h = w_o.reshape(n_heads, d_v, d_model)  # head-major view of fc weight

    out, attn = pl.pallas_call(
        functools.partial(_mha_attn_ln_kernel, d_k=d_k, eps=_LN_EPS),
        out_shape=(
            jax.ShapeDtypeStruct((B, Lq, d_model), x_q.dtype),
            jax.ShapeDtypeStruct((B, n_heads, Lq, Lk), attn_dtype),
        ),
        grid_spec=pltpu.PrefetchScalarGridSpec(
            num_scalar_prefetch=0,
            grid=(B, n_qt),
            in_specs=[
                pl.BlockSpec((1, n_heads, tq, d_k), lambda b, qi: (b, 0, qi, 0)),
                pl.BlockSpec((1, n_heads, Lk, d_k), lambda b, qi: (b, 0, 0, 0)),
                pl.BlockSpec((1, n_heads, Lk, d_v), lambda b, qi: (b, 0, 0, 0)),
                pl.BlockSpec((1, tq, Lk), lambda b, qi: (b, qi, 0)),
                pl.BlockSpec((1, tq, d_model), lambda b, qi: (b, qi, 0)),
                pl.BlockSpec((n_heads, d_v, d_model), lambda b, qi: (0, 0, 0)),
            ],
            out_specs=[
                pl.BlockSpec((1, tq, d_model), lambda b, qi: (b, qi, 0)),
                pl.BlockSpec((1, n_heads, tq, Lk), lambda b, qi: (b, 0, qi, 0)),
            ],
        ),
        compiler_params=_cparams("parallel", "parallel"),
    )(q, k, v, mask_i8, x_q, w_o_h)

    return out, attn


def _ffn_forward(x, w1, w2, *, l_block=256):
    B, L, d_model = x.shape
    d_ff = w1.shape[1]
    tl = L if L <= l_block else l_block
    assert L % tl == 0, "sequence length must be a multiple of the tile"
    return pl.pallas_call(
        functools.partial(_ffn_add_ln_kernel, eps=_LN_EPS),
        out_shape=jax.ShapeDtypeStruct((B, L, d_model), x.dtype),
        grid_spec=pltpu.PrefetchScalarGridSpec(
            num_scalar_prefetch=0,
            grid=(B, L // tl),
            in_specs=[
                pl.BlockSpec((1, tl, d_model), lambda b, li: (b, li, 0)),
                pl.BlockSpec((d_model, d_ff), lambda b, li: (0, 0)),
                pl.BlockSpec((d_ff, d_model), lambda b, li: (0, 0)),
            ],
            out_specs=pl.BlockSpec((1, tl, d_model), lambda b, li: (b, li, 0)),
        ),
        compiler_params=_cparams("parallel", "parallel"),
    )(x, w1, w2)


def decoder_layer_forward(params, dec_inputs, enc_outputs,
                          dec_self_attn_mask, dec_enc_attn_mask,
                          *, n_heads, d_k, d_v, attn_dtype=jnp.bfloat16):
    p_self, p_cross, p_ffn = params["self"], params["cross"], params["ffn"]
    x, dec_self_attn = _mha_forward(
        dec_inputs, dec_inputs, dec_self_attn_mask,
        p_self["wq"], p_self["wk"], p_self["wv"], p_self["wo"],
        n_heads=n_heads, d_k=d_k, d_v=d_v, attn_dtype=attn_dtype)
    x, dec_enc_attn = _mha_forward(
        x, enc_outputs, dec_enc_attn_mask,
        p_cross["wq"], p_cross["wk"], p_cross["wv"], p_cross["wo"],
        n_heads=n_heads, d_k=d_k, d_v=d_v, attn_dtype=attn_dtype)
    x = _ffn_forward(x, p_ffn["w1"], p_ffn["w2"])
    return x, dec_self_attn, dec_enc_attn


# ----------------------------------------------------------------------------
# Pure-JAX reference (mirrors the PyTorch module)
# ----------------------------------------------------------------------------
def _layer_norm_ref(x, eps=_LN_EPS):
    mu = jnp.mean(x, axis=-1, keepdims=True)
    var = jnp.mean(jnp.square(x - mu), axis=-1, keepdims=True)
    return (x - mu) / jnp.sqrt(var + eps)


def _mha_ref(xq, xkv, mask, wq, wk, wv, wo, n_heads, d_k, d_v):
    B, Lq, _ = xq.shape
    Lk = xkv.shape[1]
    q = (xq @ wq).reshape(B, Lq, n_heads, d_k).transpose(0, 2, 1, 3)
    k = (xkv @ wk).reshape(B, Lk, n_heads, d_k).transpose(0, 2, 1, 3)
    v = (xkv @ wv).reshape(B, Lk, n_heads, d_v).transpose(0, 2, 1, 3)
    scores = jnp.einsum("bhqd,bhkd->bhqk", q, k) / jnp.sqrt(jnp.float32(d_k))
    scores = jnp.where(mask[:, None, :, :], jnp.float32(_MASK_FILL), scores)
    attn = jax.nn.softmax(scores, axis=-1)
    ctx = jnp.einsum("bhqk,bhkv->bhqv", attn, v)
    ctx = ctx.transpose(0, 2, 1, 3).reshape(B, Lq, n_heads * d_v)
    return _layer_norm_ref(ctx @ wo + xq), attn


def _decoder_layer_ref(params, dec_inputs, enc_outputs, m_self, m_enc,
                       n_heads, d_k, d_v):
    p_self, p_cross, p_ffn = params["self"], params["cross"], params["ffn"]
    x, a1 = _mha_ref(dec_inputs, dec_inputs, m_self,
                     p_self["wq"], p_self["wk"], p_self["wv"], p_self["wo"],
                     n_heads, d_k, d_v)
    x, a2 = _mha_ref(x, enc_outputs, m_enc,
                     p_cross["wq"], p_cross["wk"], p_cross["wv"], p_cross["wo"],
                     n_heads, d_k, d_v)
    y = jnp.maximum(x @ p_ffn["w1"], 0.0) @ p_ffn["w2"] + x
    return _layer_norm_ref(y), a1, a2


# ----------------------------------------------------------------------------
# Demo / correctness check
# ----------------------------------------------------------------------------
if __name__ == "__main__":
    # NOTE: demo shapes are deliberately tiny; production sizes should use
    # L / d_model as multiples of 128 (d_k ideally 128) for lane-dense tiles.
    B, tgt_len, src_len = 2, 8, 8
    d_model, d_ff, d_k, d_v, n_heads = 32, 64, 16, 16, 2

    key = jax.random.PRNGKey(0)
    keys = jax.random.split(key, 13)

    dec_inputs = jax.random.normal(keys[0], (B, tgt_len, d_model), jnp.float32)
    enc_outputs = jax.random.normal(keys[1], (B, src_len, d_model), jnp.float32)

    causal = jnp.triu(jnp.ones((tgt_len, tgt_len), dtype=jnp.bool_), k=1)
    dec_self_attn_mask = jnp.broadcast_to(causal, (B, tgt_len, tgt_len))
    dec_enc_attn_mask = jax.random.bernoulli(keys[2], p=0.2,
                                             shape=(B, tgt_len, src_len))

    def _init(k, shape):
        return jax.random.normal(k, shape, jnp.float32) / jnp.sqrt(
            jnp.float32(shape[0]))

    params = {
        "self": {
            "wq": _init(keys[3], (d_model, n_heads * d_k)),
            "wk": _init(keys[4], (d_model, n_heads * d_k)),
            "wv": _init(keys[5], (d_model, n_heads * d_v)),
            "wo": _init(keys[6], (n_heads * d_v, d_model)),
        },
        "cross": {
            "wq": _init(keys[7], (d_model, n_heads * d_k)),
            "wk": _init(keys[8], (d_model, n_heads * d_k)),
            "wv": _init(keys[9], (d_model, n_heads * d_v)),
            "wo": _init(keys[10], (n_heads * d_v, d_model)),
        },
        "ffn": {
            "w1": _init(keys[11], (d_model, d_ff)),
            "w2": _init(keys[12], (d_ff, d_model)),
        },
    }

    dec_out, self_attn, enc_attn = decoder_layer_forward(
        params, dec_inputs, enc_outputs, dec_self_attn_mask, dec_enc_attn_mask,
        n_heads=n_heads, d_k=d_k, d_v=d_v)
    jax.block_until_ready((dec_out, self_attn, enc_attn))

    ref_out, ref_sa, ref_ea = _decoder_layer_ref(
        params, dec_inputs, enc_outputs, dec_self_attn_mask, dec_enc_attn_mask,
        n_heads, d_k, d_v)

    assert dec_out.shape == (B, tgt_len, d_model)
    assert self_attn.shape == (B, n_heads, tgt_len, tgt_len)
    assert enc_attn.shape == (B, n_heads, tgt_len, src_len)
    assert jnp.allclose(self_attn.astype(jnp.float32), ref_sa,
                        atol=5e-3, rtol=5e-3)
    assert jnp.allclose(enc_attn.astype(jnp.float32), ref_ea,
                        atol=5e-3, rtol=5e-3)
    assert jnp.allclose(dec_out, ref_out, atol=5e-3, rtol=5e-3)

    print("KERNEL_OK")
</pallas_src>

<mosaic_0001>
module attributes {stable_mosaic.version = 11 : i64} {
  func.func @_qkv_proj_self_kernel(%arg0: i32, %arg1: i32, %arg2: memref<1x8x32xf32, #tpu.memory_space<vmem>>, %arg3: memref<32x96xf32, #tpu.memory_space<vmem>>, %arg4: memref<1x2x8x16xf32, #tpu.memory_space<vmem>>, %arg5: memref<1x2x8x16xf32, #tpu.memory_space<vmem>>, %arg6: memref<1x2x8x16xf32, #tpu.memory_space<vmem>>) attributes {dimension_semantics = [#tpu.dimension_semantics<parallel>, #tpu.dimension_semantics<parallel>], iteration_bounds = array<i64: 2, 1>, scalar_prefetch = 0 : i64, scratch_operands = 0 : i64, tpu.core_type = #tpu.core_type<tc>, window_params = [{transform_indices = @transform_0, window_bounds = array<i64: 1, 8, 32>}, {pipeline_mode = #tpu.pipeline_mode<synchronous>, transform_indices = @transform_1, window_bounds = array<i64: 32, 96>}, {transform_indices = @transform_2, window_bounds = array<i64: 1, 2, 8, 16>}, {transform_indices = @transform_3, window_bounds = array<i64: 1, 2, 8, 16>}, {transform_indices = @transform_4, window_bounds = array<i64: 1, 2, 8, 16>}]} {
    %c0 = arith.constant 0 : index
    %c0_0 = arith.constant 0 : index
    %c0_1 = arith.constant 0 : index
    %0 = vector.load %arg2[%c0, %c0_0, %c0_1] : memref<1x8x32xf32, #tpu.memory_space<vmem>>, vector<1x8x32xf32>
    %1 = vector.shape_cast %0 : vector<1x8x32xf32> to vector<8x32xf32>
    %c0_2 = arith.constant 0 : index
    %c0_3 = arith.constant 0 : index
    %2 = vector.load %arg3[%c0_2, %c0_3] : memref<32x96xf32, #tpu.memory_space<vmem>>, vector<32x96xf32>
    %cst = arith.constant dense<0.000000e+00> : vector<8x96xf32>
    %3 = tpu.matmul %1, %2, %cst {dimension_numbers = #tpu.dot_dimension_numbers<[1], [0], [0], [1], [0, 0, 1, 1], [], []>} : vector<8x32xf32>, vector<32x96xf32>, vector<8x96xf32> -> vector<8x96xf32>
    %4 = vector.extract_strided_slice %3 {offsets = [0, 0], sizes = [8, 16], strides = [1, 1]} : vector<8x96xf32> to vector<8x16xf32>
    %c0_4 = arith.constant 0 : index
    %c0_5 = arith.constant 0 : index
    %c0_6 = arith.constant 0 : index
    %c0_7 = arith.constant 0 : index
    %5 = vector.load %arg4[%c0_4, %c0_5, %c0_6, %c0_7] : memref<1x2x8x16xf32, #tpu.memory_space<vmem>>, vector<1x1x8x16xf32>
    %6 = vector.shape_cast %5 : vector<1x1x8x16xf32> to vector<8x16xf32>
    %7 = vector.shape_cast %4 : vector<8x16xf32> to vector<1x1x8x16xf32>
    tpu.vector_store %arg4[%c0_4, %c0_5, %c0_6, %c0_7], %7 {strides = array<i32>} : memref<1x2x8x16xf32, #tpu.memory_space<vmem>>, vector<1x1x8x16xf32>,
    %8 = vector.extract_strided_slice %3 {offsets = [0, 32], sizes = [8, 16], strides = [1, 1]} : vector<8x96xf32> to vector<8x16xf32>
    %c0_8 = arith.constant 0 : index
    %c0_9 = arith.constant 0 : index
    %c0_10 = arith.constant 0 : index
    %c0_11 = arith.constant 0 : index
    %9 = vector.load %arg5[%c0_8, %c0_9, %c0_10, %c0_11] : memref<1x2x8x16xf32, #tpu.memory_space<vmem>>, vector<1x1x8x16xf32>
    %10 = vector.shape_cast %9 : vector<1x1x8x16xf32> to vector<8x16xf32>
    %11 = vector.shape_cast %8 : vector<8x16xf32> to vector<1x1x8x16xf32>
    tpu.vector_store %arg5[%c0_8, %c0_9, %c0_10, %c0_11], %11 {strides = array<i32>} : memref<1x2x8x16xf32, #tpu.memory_space<vmem>>, vector<1x1x8x16xf32>,
    %12 = vector.extract_strided_slice %3 {offsets = [0, 64], sizes = [8, 16], strides = [1, 1]} : vector<8x96xf32> to vector<8x16xf32>
    %c0_12 = arith.constant 0 : index
    %c0_13 = arith.constant 0 : index
    %c0_14 = arith.constant 0 : index
    %c0_15 = arith.constant 0 : index
    %13 = vector.load %arg6[%c0_12, %c0_13, %c0_14, %c0_15] : memref<1x2x8x16xf32, #tpu.memory_space<vmem>>, vector<1x1x8x16xf32>
    %14 = vector.shape_cast %13 : vector<1x1x8x16xf32> to vector<8x16xf32>
    %15 = vector.shape_cast %12 : vector<8x16xf32> to vector<1x1x8x16xf32>
    tpu.vector_store %arg6[%c0_12, %c0_13, %c0_14, %c0_15], %15 {strides = array<i32>} : memref<1x2x8x16xf32, #tpu.memory_space<vmem>>, vector<1x1x8x16xf32>,
    %16 = vector.extract_strided_slice %3 {offsets = [0, 16], sizes = [8, 16], strides = [1, 1]} : vector<8x96xf32> to vector<8x16xf32>
    %c0_16 = arith.constant 0 : index
    %c1 = arith.constant 1 : index
    %c0_17 = arith.constant 0 : index
    %c0_18 = arith.constant 0 : index
    %17 = vector.load %arg4[%c0_16, %c1, %c0_17, %c0_18] : memref<1x2x8x16xf32, #tpu.memory_space<vmem>>, vector<1x1x8x16xf32>
    %18 = vector.shape_cast %17 : vector<1x1x8x16xf32> to vector<8x16xf32>
    %19 = vector.shape_cast %16 : vector<8x16xf32> to vector<1x1x8x16xf32>
    tpu.vector_store %arg4[%c0_16, %c1, %c0_17, %c0_18], %19 {strides = array<i32>} : memref<1x2x8x16xf32, #tpu.memory_space<vmem>>, vector<1x1x8x16xf32>,
    %20 = vector.extract_strided_slice %3 {offsets = [0, 48], sizes = [8, 16], strides = [1, 1]} : vector<8x96xf32> to vector<8x16xf32>
    %c0_19 = arith.constant 0 : index
    %c1_20 = arith.constant 1 : index
    %c0_21 = arith.constant 0 : index
    %c0_22 = arith.constant 0 : index
    %21 = vector.load %arg5[%c0_19, %c1_20, %c0_21, %c0_22] : memref<1x2x8x16xf32, #tpu.memory_space<vmem>>, vector<1x1x8x16xf32>
    %22 = vector.shape_cast %21 : vector<1x1x8x16xf32> to vector<8x16xf32>
    %23 = vector.shape_cast %20 : vector<8x16xf32> to vector<1x1x8x16xf32>
    tpu.vector_store %arg5[%c0_19, %c1_20, %c0_21, %c0_22], %23 {strides = array<i32>} : memref<1x2x8x16xf32, #tpu.memory_space<vmem>>, vector<1x1x8x16xf32>,
    %24 = vector.extract_strided_slice %3 {offsets = [0, 80], sizes = [8, 16], strides = [1, 1]} : vector<8x96xf32> to vector<8x16xf32>
    %c0_23 = arith.constant 0 : index
    %c1_24 = arith.constant 1 : index
    %c0_25 = arith.constant 0 : index
    %c0_26 = arith.constant 0 : index
    %25 = vector.load %arg6[%c0_23, %c1_24, %c0_25, %c0_26] : memref<1x2x8x16xf32, #tpu.memory_space<vmem>>, vector<1x1x8x16xf32>
    %26 = vector.shape_cast %25 : vector<1x1x8x16xf32> to vector<8x16xf32>
    %27 = vector.shape_cast %24 : vector<8x16xf32> to vector<1x1x8x16xf32>
    tpu.vector_store %arg6[%c0_23, %c1_24, %c0_25, %c0_26], %27 {strides = array<i32>} : memref<1x2x8x16xf32, #tpu.memory_space<vmem>>, vector<1x1x8x16xf32>,
    return
  }
  func.func @transform_0(%arg0: i32, %arg1: i32) -> (i32, i32, i32) {
    %c0_i32 = arith.constant 0 : i32
    %c0_i32_0 = arith.constant 0 : i32
    return %arg0, %arg1, %c0_i32 : i32, i32, i32
  }
  func.func @transform_1(%arg0: i32, %arg1: i32) -> (i32, i32) {
    %c0_i32 = arith.constant 0 : i32
    %c0_i32_0 = arith.constant 0 : i32
    %c0_i32_1 = arith.constant 0 : i32
    return %c0_i32, %c0_i32_0 : i32, i32
  }
  func.func @transform_2(%arg0: i32, %arg1: i32) -> (i32, i32, i32, i32) {
    %c0_i32 = arith.constant 0 : i32
    %c0_i32_0 = arith.constant 0 : i32
    %c0_i32_1 = arith.constant 0 : i32
    return %arg0, %c0_i32, %arg1, %c0_i32_0 : i32, i32, i32, i32
  }
  func.func @transform_3(%arg0: i32, %arg1: i32) -> (i32, i32, i32, i32) {
    %c0_i32 = arith.constant 0 : i32
    %c0_i32_0 = arith.constant 0 : i32
    %c0_i32_1 = arith.constant 0 : i32
    return %arg0, %c0_i32, %arg1, %c0_i32_0 : i32, i32, i32, i32
  }
  func.func @transform_4(%arg0: i32, %arg1: i32) -> (i32, i32, i32, i32) {
    %c0_i32 = arith.constant 0 : i32
    %c0_i32_0 = arith.constant 0 : i32
    %c0_i32_1 = arith.constant 0 : i32
    return %arg0, %c0_i32, %arg1, %c0_i32_0 : i32, i32, i32, i32
  }
}

</mosaic_0001>

<llo_original>
// kernel: tpu_custom_call.1
$region0: #{tpu_custom_call.1}
  #allocation0 [shape = 'u32[]', space=smem, size = 0x4, offset = 0x4, fixed_abs, tag = 'smem constant byte address 0x4 - core index']
  #allocation1 [shape = 'u32[144,128]{1,0:T(1,128)}', space=vmem, size = 0x12000, scoped, tag = 'internal scratch']
  %s0 = inlined_call_operand.hbm [shape: f32[2,8,32], index: 0, kind: input, shape index: {}]
  %s1 = inlined_call_operand.hbm [shape: f32[32,96], index: 1, kind: input, shape index: {}]
  %s2 = inlined_call_operand.hbm [shape: f32[2,2,8,16], index: 2, kind: output, shape index: {0}]
  %s3 = inlined_call_operand.hbm [shape: f32[2,2,8,16], index: 3, kind: output, shape index: {1}]
  %s4 = inlined_call_operand.hbm [shape: f32[2,2,8,16], index: 4, kind: output, shape index: {2}]
  %5 = xla_tuple %s2, %s3, %s4
  %s6 = sld [smem:[#allocation0]]
  $region65: #{tpu_custom_call.1} parent=0
    _
  %s8 = ssub.s32 1, %s6
  %s9 = scalar_select 0, %s8, %s6
  $region1: #{tpu_custom_call.1} parent=0
    #allocation2 [shape = 'u8[8192]{0}', space=vmem, size = 0x2000, scoped, tag = 'input window, operand 0']
    #allocation3 [shape = 's32[2]{0}', space=sflag, size = 0x8, scoped, tag = 'scoped memory for tpu_custom_call.1']
    #allocation4 [shape = 's32[2]{0}', space=sflag, size = 0x8, scoped, tag = 'scoped memory for tpu_custom_call.1']
    #allocation5 [shape = 'u8[16384]{0}', space=vmem, size = 0x4000, scoped, tag = 'input window, operand 1, single buffered']
    #allocation6 [shape = 's32[1]{0}', space=sflag, size = 0x4, scoped, tag = 'scoped memory for tpu_custom_call.1']
    #allocation7 [shape = 'u8[16384]{0}', space=vmem, size = 0x4000, scoped, tag = 'output window, operand 0']
    #allocation8 [shape = 'u8[16384]{0}', space=vmem, size = 0x4000, scoped, tag = 'output window, operand 1']
    #allocation9 [shape = 's32[2]{0}', space=sflag, size = 0x8, scoped, tag = 'scoped memory for tpu_custom_call.1']
    #allocation10 [shape = 'u8[16384]{0}', space=vmem, size = 0x4000, scoped, tag = 'output window, operand 2']
    %10 = vsyncpa [#allocation3], 0
    %s11 = scalar_lea.sflag [#allocation3], 1
    %12 = vsyncpa %s11, 0
    %13 = vsyncpa [#allocation6], 0
    %14 = vsyncpa [#allocation4], 0
    %s15 = scalar_lea.sflag [#allocation4], 1
    %16 = vsyncpa %s15, 0
    %17 = vsyncpa [#allocation9], 0
    %s18 = scalar_lea.sflag [#allocation9], 1
    %19 = vsyncpa %s18, 0
    loop: start=0, step=1, limit=4
    $region2: #{tpu_custom_call.1} parent=1 // loop_pre_header
      _
    $region3: #{tpu_custom_call.1} parent=1 // loop_header
      %s21 = sphi 0, %s25
      %p22 = scmp.ge.s32.totalorder %s21, 4
      %s28 = sphi 0, %s40
      %s29 = sphi 0, %s36
      %s30 = sphi 0, %s28
      %s31 = sphi 0, %s29
      %s32 = sphi 0, %s30
      %s33 = sphi 0, %s31
      %s45 = sphi 0, %s47
      %s48 = sphi 0, %s45
      %s49 = sphi 0, %s48
      %s65 = sphi 0, %s49
      %s69 = sphi 0, %s69
      %s71 = sphi 0, %s69
      %s72 = sphi 0, %s71
      %s86 = sphi 0, %s72
      %s94 = sphi 0, %s96
      %s97 = sphi 0, %s94
      %s98 = sphi 0, %s97
      %s114 = sphi 0, %s98
      %s122 = sphi 0, %s124
      %s125 = sphi 0, %s122
      %s126 = sphi 0, %s125
      %s142 = sphi 0, %s126
      %s150 = sphi 0, %s152
      %s153 = sphi 0, %s150
      %s154 = sphi 0, %s153
      %s170 = sphi 0, %s154
    $region4: #{tpu_custom_call.1} parent=1 // loop_header_branch
      %24 = sbr.rel (%p22) target = $region8
    $region5: #{tpu_custom_call.1} parent=1 // loop_body
      %s26 = ssub.s32 %s21, 1
      %s27 = ssub.s32 %s21, 2
      %s34 = sadd.s32 1, %s29
      %p35 = scmp.ge.s32.totalorder %s34, 1
      %s36 = scalar_select %p35, 0, %s34
      %s37 = sadd.s32 1, %s28
      %s38 = scalar_select %p35, %s37, %s28
      %p39 = scmp.ge.s32.totalorder %s38, 2
      %s40 = scalar_select %p39, 0, %s38
      %s41 = ssub.s32 %s28, %s40
      %s42 = ssub.s32 %s29, %s36
      %s43 = sor.u32 %s41, %s42
      %p44 = scmp.eq.s32.totalorder %s43, 0
      %s46 = sadd.s32 %s45, 1
      %s47 = scalar_select %p44, %s45, %s46
      %p50 = pneg %p44
      %p51 = scmp.eq.s32.totalorder %s21, 1
      %p52 = por %p50, %p51
      %p53 = scmp.ne.s32.totalorder %s45, %s48
      %p54 = scmp.eq.s32.totalorder %s21, 0
      %p55 = por %p53, %p54
      %p56 = scmp.ne.s32.totalorder %s45, %s48
      %p57 = scmp.eq.s32.totalorder %s26, 1
      %p58 = por %p56, %p57
      %p59 = scmp.ne.s32.totalorder %s48, %s49
      %p60 = scmp.eq.s32.totalorder %s26, 0
      %p61 = por %p59, %p60
      %p62 = scmp.ne.s32.totalorder %s48, %s49
      %p63 = scmp.eq.s32.totalorder %s27, 1
      %p64 = por %p62, %p63
      %p66 = scmp.ne.s32.totalorder %s49, %s65
      %p67 = scmp.eq.s32.totalorder %s27, 0
      %p68 = por %p66, %p67
      %s70 = sadd.s32 %s69, 1
      %p73 = scmp.eq.s32.totalorder %s21, 1
      %p74 = scmp.ne.s32.totalorder %s69, %s71
      %p75 = scmp.eq.s32.totalorder %s21, 0
      %p76 = por %p74, %p75
      %p77 = scmp.ne.s32.totalorder %s69, %s71
      %p78 = scmp.eq.s32.totalorder %s26, 1
      %p79 = por %p77, %p78
      %p80 = scmp.ne.s32.totalorder %s71, %s72
      %p81 = scmp.eq.s32.totalorder %s26, 0
      %p82 = por %p80, %p81
      %p83 = scmp.ne.s32.totalorder %s71, %s72
      %p84 = scmp.eq.s32.totalorder %s27, 1
      %p85 = por %p83, %p84
      %p87 = scmp.ne.s32.totalorder %s72, %s86
      %p88 = scmp.eq.s32.totalorder %s27, 0
      %p89 = por %p87, %p88
      %s90 = ssub.s32 %s28, %s40
      %s91 = ssub.s32 %s29, %s36
      %s92 = sor.u32 %s90, %s91
      %p93 = scmp.eq.s32.totalorder %s92, 0
      %s95 = sadd.s32 %s94, 1
      %s96 = scalar_select %p93, %s94, %s95
      %p99 = pneg %p93
      %p100 = scmp.eq.s32.totalorder %s21, 1
      %p101 = por %p99, %p100
      %p102 = scmp.ne.s32.totalorder %s94, %s97
      %p103 = scmp.eq.s32.totalorder %s21, 0
      %p104 = por %p102, %p103
      %p105 = scmp.ne.s32.totalorder %s94, %s97
      %p106 = scmp.eq.s32.totalorder %s26, 1
      %p107 = por %p105, %p106
      %p108 = scmp.ne.s32.totalorder %s97, %s98
      %p109 = scmp.eq.s32.totalorder %s26, 0
      %p110 = por %p108, %p109
      %p111 = scmp.ne.s32.totalorder %s97, %s98
      %p112 = scmp.eq.s32.totalorder %s27, 1
      %p113 = por %p111, %p112
      %p115 = scmp.ne.s32.totalorder %s98, %s114
      %p116 = scmp.eq.s32.totalorder %s27, 0
      %p117 = por %p115, %p116
      %s118 = ssub.s32 %s28, %s40
      %s119 = ssub.s32 %s29, %s36
      %s120 = sor.u32 %s118, %s119
      %p121 = scmp.eq.s32.totalorder %s120, 0
      %s123 = sadd.s32 %s122, 1
      %s124 = scalar_select %p121, %s122, %s123
      %p127 = pneg %p121
      %p128 = scmp.eq.s32.totalorder %s21, 1
      %p129 = por %p127, %p128
      %p130 = scmp.ne.s32.totalorder %s122, %s125
      %p131 = scmp.eq.s32.totalorder %s21, 0
      %p132 = por %p130, %p131
      %p133 = scmp.ne.s32.totalorder %s122, %s125
      %p134 = scmp.eq.s32.totalorder %s26, 1
      %p135 = por %p133, %p134
      %p136 = scmp.ne.s32.totalorder %s125, %s126
      %p137 = scmp.eq.s32.totalorder %s26, 0
      %p138 = por %p136, %p137
      %p139 = scmp.ne.s32.totalorder %s125, %s126
      %p140 = scmp.eq.s32.totalorder %s27, 1
      %p141 = por %p139, %p140
      %p143 = scmp.ne.s32.totalorder %s126, %s142
      %p144 = scmp.eq.s32.totalorder %s27, 0
      %p145 = por %p143, %p144
      %s146 = ssub.s32 %s28, %s40
      %s147 = ssub.s32 %s29, %s36
      %s148 = sor.u32 %s146, %s147
      %p149 = scmp.eq.s32.totalorder %s148, 0
      %s151 = sadd.s32 %s150, 1
      %s152 = scalar_select %p149, %s150, %s151
      %p155 = pneg %p149
      %p156 = scmp.eq.s32.totalorder %s21, 1
      %p157 = por %p155, %p156
      %p158 = scmp.ne.s32.totalorder %s150, %s153
      %p159 = scmp.eq.s32.totalorder %s21, 0
      %p160 = por %p158, %p159
      %p161 = scmp.ne.s32.totalorder %s150, %s153
      %p162 = scmp.eq.s32.totalorder %s26, 1
      %p163 = por %p161, %p162
      %p164 = scmp.ne.s32.totalorder %s153, %s154
      %p165 = scmp.eq.s32.totalorder %s26, 0
      %p166 = por %p164, %p165
      %p167 = scmp.ne.s32.totalorder %s153, %s154
      %p168 = scmp.eq.s32.totalorder %s27, 1
      %p169 = por %p167, %p168
      %p171 = scmp.ne.s32.totalorder %s154, %s170
      %p172 = scmp.eq.s32.totalorder %s27, 0
      %p173 = por %p171, %p172
      %p174 = scmp.le.s32.totalorder 1, %s21
      %p175 = scmp.lt.s32.totalorder %s21, 3
      %p176 = pnand %p174, %p175
      %p177 = pneg %p176
      // Predicated region
      $region9: #{tpu_custom_call.1} parent=5 // pred_check
        _
      $region10: #{tpu_custom_call.1} parent=5 // pred_check_branch
        %179 = sbr.rel (%p176) target = $region12
      $region11: #{tpu_custom_call.1} parent=5 // pred_region
        %s180 = ssub.s32 %s21, 1
        // Predicated region
        $region13: #{tpu_custom_call.1} parent=11 // pred_check
          %p181 = pneg %p82
        $region14: #{tpu_custom_call.1} parent=11 // pred_check_branch
          %183 = sbr.rel (%p181) target = $region16
        $region15: #{tpu_custom_call.1} parent=11 // pred_region
          %s185 = ssub.s32 512, 512
          %186 = vsyncadd [#allocation6], %s185
          %s187 = sshll.u32 [#allocation5], 4
          %s188 = int_to_ptr.vmem [resolvable:$true] %s187
          %193 = dma.hbm_to_vmem [thread:$0]  %s1, 512, %s188, [#allocation6], 128, 128, 8
        $region16: #{tpu_custom_call.1} parent=11 // pred_fallthru
          _
      $region12: #{tpu_custom_call.1} parent=5 // pred_fallthru
        _
      %p194 = scmp.lt.s32.totalorder %s21, 2
      // Predicated region
      $region17: #{tpu_custom_call.1} parent=5 // pred_check
        %p195 = pneg %p194
      $region18: #{tpu_custom_call.1} parent=5 // pred_check_branch
        %197 = sbr.rel (%p195) target = $region20
      $region19: #{tpu_custom_call.1} parent=5 // pred_region
        // Predicated region
        $region21: #{tpu_custom_call.1} parent=19 // pred_check
          %p198 = pneg %p55
        $region22: #{tpu_custom_call.1} parent=19 // pred_check_branch
          %200 = sbr.rel (%p198) target = $region24
        $region23: #{tpu_custom_call.1} parent=19 // pred_region
          %s201 = sand.u32 %s45, 1
          %s202 = scalar_lea.sflag [#allocation3], %s201
          %s203 = sand.u32 %s45, 1
          %s204 = smul.addr %s203, 8
          %s205 = scalar_lea.vmem [#allocation2], %s204
          %s207 = ssub.s32 128, 128
          %208 = vsyncadd %s202, %s207
          %s209 = sadd.s32 %s29, %s28
          %s210 = smul.addr %s209, 128
          %s211 = scalar_lea.hbm %s0, %s210
          %s213 = sshll.u32 %s205, 4
          %s214 = int_to_ptr.vmem [resolvable:$true] %s213
          %216 = dma.hbm_to_vmem [thread:$0]  %s211, 128, %s214, %s202
        $region24: #{tpu_custom_call.1} parent=19 // pred_fallthru
          _
      $region20: #{tpu_custom_call.1} parent=5 // pred_fallthru
        _
      %p217 = scmp.le.s32.totalorder 1, %s21
      %p218 = scmp.lt.s32.totalorder %s21, 3
      %p219 = pnand %p217, %p218
      %p220 = pneg %p219
      // Predicated region
      $region25: #{tpu_custom_call.1} parent=5 // pred_check
        _
      $region26: #{tpu_custom_call.1} parent=5 // pred_check_branch
        %222 = sbr.rel (%p219) target = $region28
      $region27: #{tpu_custom_call.1} parent=5 // pred_region
        %s223 = ssub.s32 %s21, 1
        %s224 = sand.u32 %s48, 1
        %s225 = scalar_lea.sflag [#allocation3], %s224
        %s226 = sand.u32 %s48, 1
        %s227 = smul.addr %s226, 8
        %s228 = scalar_lea.vmem [#allocation2], %s227
        // Predicated region
        $region29: #{tpu_custom_call.1} parent=27 // pred_check
          %p229 = pneg %p61
        $region30: #{tpu_custom_call.1} parent=27 // pred_check_branch
          %231 = sbr.rel (%p229) target = $region32
        $region31: #{tpu_custom_call.1} parent=27 // pred_region
          %232 = dma.done %s225, 128
        $region32: #{tpu_custom_call.1} parent=27 // pred_fallthru
          _
        // Predicated region
        $region33: #{tpu_custom_call.1} parent=27 // pred_check
          %p233 = pneg %p82
        $region34: #{tpu_custom_call.1} parent=27 // pred_check_branch
          %235 = sbr.rel (%p233) target = $region36
        $region35: #{tpu_custom_call.1} parent=27 // pred_region
          %236 = dma.done [#allocation6], 512
        $region36: #{tpu_custom_call.1} parent=27 // pred_fallthru
          _
        %s237 = sand.u32 %s48, 1
        %s238 = scalar_lea.sflag [#allocation3], %s237
        %s239 = sand.u32 %s48, 1
        %s240 = smul.addr %s239, 8
        %s241 = scalar_lea.vmem [#allocation2], %s240
        %p242 = pneg %p61
        %p243 = pneg %p58
        %p244 = pneg %p82
        %p245 = pneg %p79
        %p246 = pneg %p110
        %p247 = pneg %p107
        %s248 = sand.u32 %s97, 1
        %s249 = scalar_lea.sflag [#allocation4], %s248
        %s250 = sand.u32 %s97, 1
        %s251 = smul.addr %s250, 16
        %s252 = scalar_lea.vmem [#allocation7], %s251
        %p253 = pneg %p138
        %p254 = pneg %p135
        %s255 = sand.u32 %s26, 1
        %s256 = scalar_lea.sflag [#allocation9], %s255
        %s257 = sand.u32 %s125, 1
        %s258 = smul.addr %s257, 16
        %s259 = scalar_lea.vmem [#allocation8], %s258
        %p260 = pneg %p166
        %p261 = pneg %p163
        %s262 = sand.u32 %s26, 1
        %s263 = scalar_lea.sflag [#allocation9], %s262
        %s264 = sand.u32 %s153, 1
        %s265 = smul.addr %s264, 16
        %s266 = scalar_lea.vmem [#allocation10], %s265
        %v267 = vld [vmem:[%s228] sm:$0xff]
        %v268 = vld [vmem:[#allocation5] sm:$0xff]
        %v269 = vld [vmem:[#allocation5 + $0x8] sm:$0xff]
        %v270 = vld [vmem:[#allocation5 + $0x10] sm:$0xff]
        %v271 = vld [vmem:[#allocation5 + $0x18] sm:$0xff]
        %vm272 = vcmask 261120
        %v274 = vsel %vm272, %v267, 0
        %276 = vmatprep.subr.mxu0 0.0
        %277 = vmatpush1.msra.mxu0 0.0
        %278 = vmatprep.subr.mxu0 0.0
        %279 = vmatpush1.msra.mxu0 0.0
        %280 = vmatprep.subr.mxu0 0.0
        %281 = vmatpush1.msra.mxu0 0.0
        %282 = vmatprep.subr.mxu0 0.0
        %283 = vmatpush1.msra.mxu0 0.0
        %284 = vmatprep.subr.mxu0 0.0
        %285 = vmatpush1.msra.mxu0 0.0
        %286 = vmatprep.subr.mxu0 0.0
        %287 = vmatpush1.msra.mxu0 0.0
        %288 = vmatprep.subr.mxu0 0.0
        %289 = vmatpush1.msra.mxu0 0.0
        %290 = vmatprep.subr.mxu0 0.0
        %291 = vmatpush1.msra.mxu0 0.0
        %292 = vmatprep.subr.mxu0 0.0
        %293 = vmatpush1.msra.mxu0 0.0
        %294 = vmatprep.subr.mxu0 0.0
        %295 = vmatpush1.msra.mxu0 0.0
        %296 = vmatprep.subr.mxu0 0.0
        %297 = vmatpush1.msra.mxu0 0.0
        %298 = vmatprep.subr.mxu0 0.0
        %299 = vmatpush1.msra.mxu0 0.0
        %300 = vmatprep.subr.mxu0 0.0
        %301 = vmatpush1.msra.mxu0 %v271
        %302 = vmatprep.subr.mxu0 0.0
        %303 = vmatpush1.msra.mxu0 %v270
        %304 = vmatprep.subr.mxu0 0.0
        %305 = vmatpush1.msra.mxu0 %v269
        %306 = vmatprep.subr.mxu0 0.0
        %307 = vmatpush1.msra.mxu0 %v268
        %308 = vmatprep.subr.mxu0 0.0
        %309 = vmatpush2.msra.mxu0 0.0
        %310 = vmatprep.subr.mxu0 0.0
        %311 = vmatpush2.msra.mxu0 0.0
        %312 = vmatprep.subr.mxu0 0.0
        %313 = vmatpush2.msra.mxu0 0.0
        %314 = vmatprep.subr.mxu0 0.0
        %315 = vmatpush2.msra.mxu0 0.0
        %316 = vmatprep.subr.mxu0 0.0
        %317 = vmatpush2.msra.mxu0 0.0
        %318 = vmatprep.subr.mxu0 0.0
        %319 = vmatpush2.msra.mxu0 0.0
        %320 = vmatprep.subr.mxu0 0.0
        %321 = vmatpush2.msra.mxu0 0.0
        %322 = vmatprep.subr.mxu0 0.0
        %323 = vmatpush2.msra.mxu0 0.0
        %324 = vmatprep.subr.mxu0 0.0
        %325 = vmatpush2.msra.mxu0 0.0
        %326 = vmatprep.subr.mxu0 0.0
        %327 = vmatpush2.msra.mxu0 0.0
        %328 = vmatprep.subr.mxu0 0.0
        %329 = vmatpush2.msra.mxu0 0.0
        %330 = vmatprep.subr.mxu0 0.0
        %331 = vmatpush2.msra.mxu0 0.0
        %332 = vmatprep.subr.mxu0 0.0
        %333 = vmatpush2.msra.mxu0 0.0
        %334 = vmatprep.subr.mxu0 0.0
        %335 = vmatpush2.msra.mxu0 0.0
        %336 = vmatprep.subr.mxu0 0.0
        %337 = vmatpush2.msra.mxu0 0.0
        %338 = vmatprep.subr.mxu0 0.0
        %339 = vmatpush2.msra.mxu0 0.0
        %340 = vmatprep.mubr.f32.mxu0 0.0
        %341 = vmatmul.mubr.f32.gmra.mxu0 %v274
        %v342 = vpop.f32.mrf.mxu0
        %v343 = vadd.f32 0.0, %v342
        %v344 = vpop.f32.mrf.mxu0
        %345 = vdwg.mxu0
        %vm346 = vcmask 130048
        %347 = vst.msk [vmem:[%s252] sm:$0xff] %vm346, %v343
        %349 = vrot.lane.b32.xlu0 %v343, 96
        %v350 = vpop.permute.xlu0 %349
        %352 = vst.msk [vmem:[%s259] sm:$0xff] %vm346, %v350
        %353 = vrot.lane.b32.xlu0 %v343, 64
        %v354 = vpop.permute.xlu0 %353
        %356 = vst.msk [vmem:[%s266] sm:$0xff] %vm346, %v354
        %357 = vrot.lane.b32.xlu0 %v343, 112
        %v358 = vpop.permute.xlu0 %357
        %s360 = scalar_lea.vmem %s252, 8 [#allocation7]
        %361 = vst.msk [vmem:[%s360] sm:$0xff] %vm346, %v358
        %362 = vrot.lane.b32.xlu0 %v343, 80
        %v363 = vpop.permute.xlu0 %362
        %s365 = scalar_lea.vmem %s259, 8 [#allocation8]
        %366 = vst.msk [vmem:[%s365] sm:$0xff] %vm346, %v363
        %367 = vrot.lane.b32.xlu0 %v343, 48
        %v368 = vpop.permute.xlu0 %367
        %s370 = scalar_lea.vmem %s266, 8 [#allocation10]
        %371 = vst.msk [vmem:[%s370] sm:$0xff] %vm346, %v368
        %s372 = sand.u32 %s97, 1
        %s373 = scalar_lea.sflag [#allocation4], %s372
        %s374 = sand.u32 %s97, 1
        %s375 = smul.addr %s374, 16
        %s376 = scalar_lea.vmem [#allocation7], %s375
        %s377 = sand.u32 %s26, 1
        %s378 = scalar_lea.sflag [#allocation9], %s377
        %s379 = sand.u32 %s125, 1
        %s380 = smul.addr %s379, 16
        %s381 = scalar_lea.vmem [#allocation8], %s380
        %s382 = sand.u32 %s26, 1
        %s383 = scalar_lea.sflag [#allocation9], %s382
        %s384 = sand.u32 %s153, 1
        %s385 = smul.addr %s384, 16
        %s386 = scalar_lea.vmem [#allocation10], %s385
        // Predicated region
        $region37: #{tpu_custom_call.1} parent=27 // pred_check
          %p387 = pneg %p107
        $region38: #{tpu_custom_call.1} parent=27 // pred_check_branch
          %389 = sbr.rel (%p387) target = $region40
        $region39: #{tpu_custom_call.1} parent=27 // pred_region
          %s391 = ssub.s32 256, 256
          %392 = vsyncadd %s373, %s391
          %s393 = smul.addr %s30, 2
          %s394 = sadd.s32 %s31, %s393
          %s395 = smul.addr %s394, 128
          %s396 = scalar_lea.hbm %s2, %s395
          %s397 = sshll.u32 %s376, 4
          %s398 = int_to_ptr.vmem [resolvable:$true] %s397
          %403 = dma.vmem_to_hbm [thread:$0]  %s398, 256, %s396, %s373, 128, 128, 8
        $region40: #{tpu_custom_call.1} parent=27 // pred_fallthru
          _
        // Predicated region
        $region41: #{tpu_custom_call.1} parent=27 // pred_check
          %p404 = pneg %p135
        $region42: #{tpu_custom_call.1} parent=27 // pred_check_branch
          %406 = sbr.rel (%p404) target = $region44
        $region43: #{tpu_custom_call.1} parent=27 // pred_region
          %s408 = ssub.s32 256, 256
          %409 = vsyncadd %s378, %s408
          %s410 = smul.addr %s30, 2
          %s411 = sadd.s32 %s31, %s410
          %s412 = smul.addr %s411, 128
          %s413 = scalar_lea.hbm %s3, %s412
          %s414 = sshll.u32 %s381, 4
          %s415 = int_to_ptr.vmem [resolvable:$true] %s414
          %420 = dma.vmem_to_hbm [thread:$0]  %s415, 256, %s413, %s378, 128, 128, 8
        $region44: #{tpu_custom_call.1} parent=27 // pred_fallthru
          _
        // Predicated region
        $region45: #{tpu_custom_call.1} parent=27 // pred_check
          %p421 = pneg %p163
        $region46: #{tpu_custom_call.1} parent=27 // pred_check_branch
          %423 = sbr.rel (%p421) target = $region48
        $region47: #{tpu_custom_call.1} parent=27 // pred_region
          %s425 = ssub.s32 256, 256
          %426 = vsyncadd %s383, %s425
          %s427 = smul.addr %s30, 2
          %s428 = sadd.s32 %s31, %s427
          %s429 = smul.addr %s428, 128
          %s430 = scalar_lea.hbm %s4, %s429
          %s431 = sshll.u32 %s386, 4
          %s432 = int_to_ptr.vmem [resolvable:$true] %s431
          %437 = dma.vmem_to_hbm [thread:$0]  %s432, 256, %s430, %s383, 128, 128, 8
        $region48: #{tpu_custom_call.1} parent=27 // pred_fallthru
          _
      $region28: #{tpu_custom_call.1} parent=5 // pred_fallthru
        _
      %p438 = scmp.le.s32.totalorder 2, %s21
      // Predicated region
      $region49: #{tpu_custom_call.1} parent=5 // pred_check
        %p439 = pneg %p438
      $region50: #{tpu_custom_call.1} parent=5 // pred_check_branch
        %441 = sbr.rel (%p439) target = $region52
      $region51: #{tpu_custom_call.1} parent=5 // pred_region
        %s442 = ssub.s32 %s21, 2
        // Predicated region
        $region53: #{tpu_custom_call.1} parent=51 // pred_check
          %p443 = pneg %p113
        $region54: #{tpu_custom_call.1} parent=51 // pred_check_branch
          %445 = sbr.rel (%p443) target = $region56
        $region55: #{tpu_custom_call.1} parent=51 // pred_region
          %s446 = sand.u32 %s98, 1
          %s447 = scalar_lea.sflag [#allocation4], %s446
          %s448 = sand.u32 %s98, 1
          %s449 = smul.addr %s448, 16
          %s450 = scalar_lea.vmem [#allocation7], %s449
          %451 = dma.done %s447, 256
        $region56: #{tpu_custom_call.1} parent=51 // pred_fallthru
          _
        // Predicated region
        $region57: #{tpu_custom_call.1} parent=51 // pred_check
          %p452 = pneg %p141
        $region58: #{tpu_custom_call.1} parent=51 // pred_check_branch
          %454 = sbr.rel (%p452) target = $region60
        $region59: #{tpu_custom_call.1} parent=51 // pred_region
          %s455 = sand.u32 %s27, 1
          %s456 = scalar_lea.sflag [#allocation9], %s455
          %s457 = sand.u32 %s126, 1
          %s458 = smul.addr %s457, 16
          %s459 = scalar_lea.vmem [#allocation8], %s458
          %460 = dma.done %s456, 256
        $region60: #{tpu_custom_call.1} parent=51 // pred_fallthru
          _
        // Predicated region
        $region61: #{tpu_custom_call.1} parent=51 // pred_check
          %p461 = pneg %p169
        $region62: #{tpu_custom_call.1} parent=51 // pred_check_branch
          %463 = sbr.rel (%p461) target = $region64
        $region63: #{tpu_custom_call.1} parent=51 // pred_region
          %s464 = sand.u32 %s27, 1
          %s465 = scalar_lea.sflag [#allocation9], %s464
          %s466 = sand.u32 %s154, 1
          %s467 = smul.addr %s466, 16
          %s468 = scalar_lea.vmem [#allocation10], %s467
          %469 = dma.done %s465, 256
        $region64: #{tpu_custom_call.1} parent=51 // pred_fallthru
          _
      $region52: #{tpu_custom_call.1} parent=5 // pred_fallthru
        _
    $region6: #{tpu_custom_call.1} parent=1 // loop_footer
      %s25 = sadd.s32 1, %s21
    $region7: #{tpu_custom_call.1} parent=1 // loop_footer_branch
      %20 = sbr.rel target = $region3
    $region8: #{tpu_custom_call.1} parent=1 // loop_exit
      _
    %470 = vsyncpa [#allocation3], 1
    %s471 = scalar_lea.sflag [#allocation3], 1
    %472 = vsyncpa %s471, 1
    %473 = vsyncpa [#allocation6], 1
    %474 = vsyncpa [#allocation4], 1
    %s475 = scalar_lea.sflag [#allocation4], 1
    %476 = vsyncpa %s475, 1
    %477 = vsyncpa [#allocation9], 1
    %s478 = scalar_lea.sflag [#allocation9], 1
    %479 = vsyncpa %s478, 1

</llo_original>
